<compile_context>
chip_gen: v6e
topology: v6e:2x2x1
jax: 0.10.0
libtpu: 0.0.40
codegen_flags: <defaults>
</compile_context>

<pallas_src>
import functools

import jax
import jax.numpy as jnp
from jax import lax
from jax.experimental import pallas as pl
from jax.experimental.pallas import tpu as pltpu


def skipgram_kernel(tgt_ref, emb_hbm, w_ref, b_ref, out_ref,
                    embed_scratch, dma_sems):
    """One grid step computes one (B, TN) tile of the logits.

    tgt_ref       : (B,) int32 in SMEM (scalar-prefetched target indices)
    emb_hbm       : (V, D) embedding table left in HBM (pl.ANY)
    w_ref         : (TN, D) row tile of the Linear weight (VMEM, pipelined)
    b_ref         : (1, TN) tile of the bias (VMEM, f32)
    out_ref       : (B, TN) tile of the logits (VMEM, f32)
    embed_scratch : (B, D) VMEM scratch holding the gathered embedding rows
    dma_sems      : (B,) DMA semaphores for the row gather
    """
    B = embed_scratch.shape[0]

    # Gather the B embedding rows from HBM once; the scratch persists across
    # all V tiles of the grid.
    @pl.when(pl.program_id(0) == 0)
    def _gather():
        copies = [
            pltpu.make_async_copy(
                emb_hbm.at[pl.ds(tgt_ref[i], 1), :],   # (1, D) row in HBM
                embed_scratch.at[pl.ds(i, 1), :],      # (1, D) row in VMEM
                dma_sems.at[i],
            )
            for i in range(B)
        ]
        for c in copies:
            c.start()
        for c in copies:
            c.wait()

    # (B, D) x (TN, D)^T on the MXU with f32 accumulation; f32 bias epilogue.
    embed = embed_scratch[...].astype(w_ref.dtype)
    acc = lax.dot_general(
        embed, w_ref[...],
        dimension_numbers=(((1,), (1,)), ((), ())),
        preferred_element_type=jnp.float32,
    )
    out_ref[...] = (acc + b_ref[...]).astype(out_ref.dtype)


@functools.partial(jax.jit, static_argnames=("block_v", "weight_dtype"))
def skipgram_forward(targets, emb, w, b, *, block_v=512, weight_dtype=None):
    """targets: (B,) int; emb: (V, D); w: (V, D) Linear weight; b: (V,)."""
    B = targets.shape[0]
    V, D = emb.shape

    # Clamp indices — out-of-range indices would silently address wrong rows.
    targets = jnp.clip(targets.astype(jnp.int32), 0, V - 1)

    # Pad batch to a multiple of 8 (f32 sublane tiling). Extra rows reuse idx 0.
    B_pad = max(8, ((B + 7) // 8) * 8)
    if B_pad != B:
        targets = jnp.pad(targets, (0, B_pad - B))

    # Tile the vocab axis with lane-dense tiles (multiple of 128).
    TN = int(block_v)
    assert TN % 128 == 0, "block_v must be a multiple of 128 (lane width)"
    n_tiles = pl.cdiv(V, TN)
    V_pad = n_tiles * TN
    if V_pad != V:
        w = jnp.pad(w, ((0, V_pad - V), (0, 0)))
        b = jnp.pad(b, (0, V_pad - V))

    # Optional low-precision weight streaming (MXU operands only).
    if weight_dtype is not None:
        w = w.astype(weight_dtype)
    bias = b.astype(jnp.float32).reshape(1, V_pad)

    w_itemsize = jnp.dtype(w.dtype).itemsize
    emb_itemsize = jnp.dtype(emb.dtype).itemsize
    # Resident VMEM: double-buffered W/bias/out tiles + gathered-row scratch.
    vmem_bytes = (
        2 * TN * D * w_itemsize
        + 2 * TN * 4
        + 2 * B_pad * TN * 4
        + B_pad * D * emb_itemsize
    )
    vmem_limit = int(min(max(vmem_bytes + (4 << 20), 16 << 20), 48 << 20))

    cost = pl.CostEstimate(
        flops=2 * B_pad * D * V_pad,
        transcendentals=0,
        bytes_accessed=int(
            V_pad * D * w_itemsize        # weight stream
            + B_pad * V_pad * 4           # logits write
            + B_pad * D * emb_itemsize    # gathered embedding rows
            + V_pad * 4                   # bias
        ),
    )

    grid_spec = pltpu.PrefetchScalarGridSpec(
        num_scalar_prefetch=1,                              # targets -> SMEM
        grid=(n_tiles,),
        in_specs=[
            pl.BlockSpec(memory_space=pl.ANY),              # emb stays in HBM
            pl.BlockSpec((TN, D), lambda j, tgt: (j, 0)),   # W row tile
            pl.BlockSpec((1, TN), lambda j, tgt: (0, j)),   # bias tile
        ],
        out_specs=pl.BlockSpec((B_pad, TN), lambda j, tgt: (0, j)),
        scratch_shapes=[
            pltpu.VMEM((B_pad, D), emb.dtype),              # gathered rows
            pltpu.SemaphoreType.DMA((B_pad,)),              # gather semaphores
        ],
    )

    out = pl.pallas_call(
        skipgram_kernel,
        out_shape=jax.ShapeDtypeStruct((B_pad, V_pad), jnp.float32),
        grid_spec=grid_spec,
        compiler_params=pltpu.CompilerParams(
            # "arbitrary": the step-0 gather must run before any other V tile
            # consumes the scratch.
            # TODO(synk): for v7x megacore, gather per-core (or in the wrapper)
            # and mark this axis "parallel" to split V tiles across both TCs.
            dimension_semantics=("arbitrary",),
            vmem_limit_bytes=vmem_limit,
        ),
        cost_estimate=cost,
    )(targets, emb, w, bias)

    return out[:B, :V]


if __name__ == "__main__":
    vocab_size = 512
    embedding_dim = 128
    batch = 8

    key = jax.random.PRNGKey(0)
    k_emb, k_w, k_b, k_tgt = jax.random.split(key, 4)

    # nn.Embedding default init: N(0, 1)
    emb = jax.random.normal(k_emb, (vocab_size, embedding_dim), dtype=jnp.float32)
    # nn.Linear default init: U(-1/sqrt(fan_in), 1/sqrt(fan_in))
    bound = 1.0 / (embedding_dim ** 0.5)
    w = jax.random.uniform(
        k_w, (vocab_size, embedding_dim), minval=-bound, maxval=bound,
        dtype=jnp.float32)
    b = jax.random.uniform(
        k_b, (vocab_size,), minval=-bound, maxval=bound, dtype=jnp.float32)

    targets = jax.random.randint(k_tgt, (batch,), 0, vocab_size, dtype=jnp.int32)

    # f32 path — block_v=128 gives a 4-step V grid at this demo size, which
    # exercises the tiling / pipelining and the step-0 gather guard.
    out = skipgram_forward(targets, emb, w, b, block_v=128)
    out = jax.block_until_ready(out)

    ref = emb[targets] @ w.T + b
    assert out.shape == (batch, vocab_size)
    assert jnp.allclose(out, ref, atol=1e-4, rtol=1e-4), "f32 mismatch vs reference"

    # bf16 weight-streaming path (halves weight HBM bytes; f32 accumulation).
    out_bf16 = skipgram_forward(
        targets, emb, w, b, block_v=128, weight_dtype=jnp.bfloat16)
    out_bf16 = jax.block_until_ready(out_bf16)
    ref_bf16 = (
        emb[targets].astype(jnp.bfloat16).astype(jnp.float32)
        @ w.astype(jnp.bfloat16).astype(jnp.float32).T
    ) + b
    assert jnp.allclose(out_bf16, ref_bf16, atol=1e-2, rtol=1e-2), "bf16 mismatch"

    print("KERNEL_OK")
</pallas_src>

<mosaic_0001>
module attributes {stable_mosaic.version = 11 : i64} {
  func.func @skipgram_kernel(%arg0: i32, %arg1: memref<8xi32, #tpu.memory_space<smem>>, %arg2: memref<512x128xf32, #tpu.memory_space<any>>, %arg3: memref<128x128xf32, #tpu.memory_space<vmem>>, %arg4: memref<1x128xf32, #tpu.memory_space<vmem>>, %arg5: memref<8x128xf32, #tpu.memory_space<vmem>>, %arg6: memref<8x128xf32, #tpu.memory_space<vmem>>, %arg7: memref<8x!tpu.dma_semaphore, #tpu.memory_space<semaphore_mem>>) attributes {dimension_semantics = [#tpu.dimension_semantics<arbitrary>], iteration_bounds = array<i64: 4>, scalar_prefetch = 1 : i64, scratch_operands = 2 : i64, tpu.core_type = #tpu.core_type<tc>, window_params = [{}, {transform_indices = @transform_1, window_bounds = array<i64: 128, 128>}, {transform_indices = @transform_2, window_bounds = array<i64: 1, 128>}, {transform_indices = @transform_3, window_bounds = array<i64: 8, 128>}]} {
    %c0_i32 = arith.constant 0 : i32
    %0 = arith.cmpi eq, %arg0, %c0_i32 : i32
    %1 = arith.extui %0 : i1 to i32
    %c0_i32_0 = arith.constant 0 : i32
    %2 = arith.cmpi ne, %1, %c0_i32_0 : i32
    scf.if %2 {
      %c0_8 = arith.constant 0 : index
      %10 = memref.load %arg1[%c0_8] : memref<8xi32, #tpu.memory_space<smem>>
      %c1 = arith.constant 1 : index
      %11 = memref.load %arg1[%c1] : memref<8xi32, #tpu.memory_space<smem>>
      %c2 = arith.constant 2 : index
      %12 = memref.load %arg1[%c2] : memref<8xi32, #tpu.memory_space<smem>>
      %c3 = arith.constant 3 : index
      %13 = memref.load %arg1[%c3] : memref<8xi32, #tpu.memory_space<smem>>
      %c4 = arith.constant 4 : index
      %14 = memref.load %arg1[%c4] : memref<8xi32, #tpu.memory_space<smem>>
      %c5 = arith.constant 5 : index
      %15 = memref.load %arg1[%c5] : memref<8xi32, #tpu.memory_space<smem>>
      %c6 = arith.constant 6 : index
      %16 = memref.load %arg1[%c6] : memref<8xi32, #tpu.memory_space<smem>>
      %c7 = arith.constant 7 : index
      %17 = memref.load %arg1[%c7] : memref<8xi32, #tpu.memory_space<smem>>
      %c0_i32_9 = arith.constant 0 : i32
      %c0_i32_10 = arith.constant 0 : i32
      %18 = tpu.memref_slice %arg2[%10, %c0_i32_10] : memref<512x128xf32, #tpu.memory_space<any>> -> memref<1x128xf32, #tpu.memory_space<any>>
      %c0_i32_11 = arith.constant 0 : i32
      %c0_i32_12 = arith.constant 0 : i32
      %19 = tpu.memref_slice %arg6[%c0_i32_11, %c0_i32_12] : memref<8x128xf32, #tpu.memory_space<vmem>> -> memref<1x128xf32, #tpu.memory_space<vmem>>
      %20 = tpu.memref_slice %arg7[%c0_i32_9] : memref<8x!tpu.dma_semaphore, #tpu.memory_space<semaphore_mem>> -> memref<1x!tpu.dma_semaphore, #tpu.memory_space<semaphore_mem>>
      %21 = tpu.memref_squeeze %20 : memref<1x!tpu.dma_semaphore, #tpu.memory_space<semaphore_mem>> -> memref<!tpu.dma_semaphore, #tpu.memory_space<semaphore_mem>>
      tpu.enqueue_dma source(%18 : memref<1x128xf32, #tpu.memory_space<any>>) target(%19 : memref<1x128xf32, #tpu.memory_space<vmem>>) target_semaphore(%21 : memref<!tpu.dma_semaphore, #tpu.memory_space<semaphore_mem>>)
      %c1_i32 = arith.constant 1 : i32
      %c0_i32_13 = arith.constant 0 : i32
      %22 = tpu.memref_slice %arg2[%11, %c0_i32_13] : memref<512x128xf32, #tpu.memory_space<any>> -> memref<1x128xf32, #tpu.memory_space<any>>
      %c1_i32_14 = arith.constant 1 : i32
      %c0_i32_15 = arith.constant 0 : i32
      %23 = tpu.memref_slice %arg6[%c1_i32_14, %c0_i32_15] : memref<8x128xf32, #tpu.memory_space<vmem>> -> memref<1x128xf32, #tpu.memory_space<vmem>>
      %24 = tpu.memref_slice %arg7[%c1_i32] : memref<8x!tpu.dma_semaphore, #tpu.memory_space<semaphore_mem>> -> memref<1x!tpu.dma_semaphore, #tpu.memory_space<semaphore_mem>>
      %25 = tpu.memref_squeeze %24 : memref<1x!tpu.dma_semaphore, #tpu.memory_space<semaphore_mem>> -> memref<!tpu.dma_semaphore, #tpu.memory_space<semaphore_mem>>
      tpu.enqueue_dma source(%22 : memref<1x128xf32, #tpu.memory_space<any>>) target(%23 : memref<1x128xf32, #tpu.memory_space<vmem>>) target_semaphore(%25 : memref<!tpu.dma_semaphore, #tpu.memory_space<semaphore_mem>>)
      %c2_i32 = arith.constant 2 : i32
      %c0_i32_16 = arith.constant 0 : i32
      %26 = tpu.memref_slice %arg2[%12, %c0_i32_16] : memref<512x128xf32, #tpu.memory_space<any>> -> memref<1x128xf32, #tpu.memory_space<any>>
      %c2_i32_17 = arith.constant 2 : i32
      %c0_i32_18 = arith.constant 0 : i32
      %27 = tpu.memref_slice %arg6[%c2_i32_17, %c0_i32_18] : memref<8x128xf32, #tpu.memory_space<vmem>> -> memref<1x128xf32, #tpu.memory_space<vmem>>
      %28 = tpu.memref_slice %arg7[%c2_i32] : memref<8x!tpu.dma_semaphore, #tpu.memory_space<semaphore_mem>> -> memref<1x!tpu.dma_semaphore, #tpu.memory_space<semaphore_mem>>
      %29 = tpu.memref_squeeze %28 : memref<1x!tpu.dma_semaphore, #tpu.memory_space<semaphore_mem>> -> memref<!tpu.dma_semaphore, #tpu.memory_space<semaphore_mem>>
      tpu.enqueue_dma source(%26 : memref<1x128xf32, #tpu.memory_space<any>>) target(%27 : memref<1x128xf32, #tpu.memory_space<vmem>>) target_semaphore(%29 : memref<!tpu.dma_semaphore, #tpu.memory_space<semaphore_mem>>)
      %c3_i32 = arith.constant 3 : i32
      %c0_i32_19 = arith.constant 0 : i32
      %30 = tpu.memref_slice %arg2[%13, %c0_i32_19] : memref<512x128xf32, #tpu.memory_space<any>> -> memref<1x128xf32, #tpu.memory_space<any>>
      %c3_i32_20 = arith.constant 3 : i32
      %c0_i32_21 = arith.constant 0 : i32
      %31 = tpu.memref_slice %arg6[%c3_i32_20, %c0_i32_21] : memref<8x128xf32, #tpu.memory_space<vmem>> -> memref<1x128xf32, #tpu.memory_space<vmem>>
      %32 = tpu.memref_slice %arg7[%c3_i32] : memref<8x!tpu.dma_semaphore, #tpu.memory_space<semaphore_mem>> -> memref<1x!tpu.dma_semaphore, #tpu.memory_space<semaphore_mem>>
      %33 = tpu.memref_squeeze %32 : memref<1x!tpu.dma_semaphore, #tpu.memory_space<semaphore_mem>> -> memref<!tpu.dma_semaphore, #tpu.memory_space<semaphore_mem>>
      tpu.enqueue_dma source(%30 : memref<1x128xf32, #tpu.memory_space<any>>) target(%31 : memref<1x128xf32, #tpu.memory_space<vmem>>) target_semaphore(%33 : memref<!tpu.dma_semaphore, #tpu.memory_space<semaphore_mem>>)
      %c4_i32 = arith.constant 4 : i32
      %c0_i32_22 = arith.constant 0 : i32
      %34 = tpu.memref_slice %arg2[%14, %c0_i32_22] : memref<512x128xf32, #tpu.memory_space<any>> -> memref<1x128xf32, #tpu.memory_space<any>>
      %c4_i32_23 = arith.constant 4 : i32
      %c0_i32_24 = arith.constant 0 : i32
      %35 = tpu.memref_slice %arg6[%c4_i32_23, %c0_i32_24] : memref<8x128xf32, #tpu.memory_space<vmem>> -> memref<1x128xf32, #tpu.memory_space<vmem>>
      %36 = tpu.memref_slice %arg7[%c4_i32] : memref<8x!tpu.dma_semaphore, #tpu.memory_space<semaphore_mem>> -> memref<1x!tpu.dma_semaphore, #tpu.memory_space<semaphore_mem>>
      %37 = tpu.memref_squeeze %36 : memref<1x!tpu.dma_semaphore, #tpu.memory_space<semaphore_mem>> -> memref<!tpu.dma_semaphore, #tpu.memory_space<semaphore_mem>>
      tpu.enqueue_dma source(%34 : memref<1x128xf32, #tpu.memory_space<any>>) target(%35 : memref<1x128xf32, #tpu.memory_space<vmem>>) target_semaphore(%37 : memref<!tpu.dma_semaphore, #tpu.memory_space<semaphore_mem>>)
      %c5_i32 = arith.constant 5 : i32
      %c0_i32_25 = arith.constant 0 : i32
      %38 = tpu.memref_slice %arg2[%15, %c0_i32_25] : memref<512x128xf32, #tpu.memory_space<any>> -> memref<1x128xf32, #tpu.memory_space<any>>
      %c5_i32_26 = arith.constant 5 : i32
      %c0_i32_27 = arith.constant 0 : i32
      %39 = tpu.memref_slice %arg6[%c5_i32_26, %c0_i32_27] : memref<8x128xf32, #tpu.memory_space<vmem>> -> memref<1x128xf32, #tpu.memory_space<vmem>>
      %40 = tpu.memref_slice %arg7[%c5_i32] : memref<8x!tpu.dma_semaphore, #tpu.memory_space<semaphore_mem>> -> memref<1x!tpu.dma_semaphore, #tpu.memory_space<semaphore_mem>>
      %41 = tpu.memref_squeeze %40 : memref<1x!tpu.dma_semaphore, #tpu.memory_space<semaphore_mem>> -> memref<!tpu.dma_semaphore, #tpu.memory_space<semaphore_mem>>
      tpu.enqueue_dma source(%38 : memref<1x128xf32, #tpu.memory_space<any>>) target(%39 : memref<1x128xf32, #tpu.memory_space<vmem>>) target_semaphore(%41 : memref<!tpu.dma_semaphore, #tpu.memory_space<semaphore_mem>>)
      %c6_i32 = arith.constant 6 : i32
      %c0_i32_28 = arith.constant 0 : i32
      %42 = tpu.memref_slice %arg2[%16, %c0_i32_28] : memref<512x128xf32, #tpu.memory_space<any>> -> memref<1x128xf32, #tpu.memory_space<any>>
      %c6_i32_29 = arith.constant 6 : i32
      %c0_i32_30 = arith.constant 0 : i32
      %43 = tpu.memref_slice %arg6[%c6_i32_29, %c0_i32_30] : memref<8x128xf32, #tpu.memory_space<vmem>> -> memref<1x128xf32, #tpu.memory_space<vmem>>
      %44 = tpu.memref_slice %arg7[%c6_i32] : memref<8x!tpu.dma_semaphore, #tpu.memory_space<semaphore_mem>> -> memref<1x!tpu.dma_semaphore, #tpu.memory_space<semaphore_mem>>
      %45 = tpu.memref_squeeze %44 : memref<1x!tpu.dma_semaphore, #tpu.memory_space<semaphore_mem>> -> memref<!tpu.dma_semaphore, #tpu.memory_space<semaphore_mem>>
      tpu.enqueue_dma source(%42 : memref<1x128xf32, #tpu.memory_space<any>>) target(%43 : memref<1x128xf32, #tpu.memory_space<vmem>>) target_semaphore(%45 : memref<!tpu.dma_semaphore, #tpu.memory_space<semaphore_mem>>)
      %c7_i32 = arith.constant 7 : i32
      %c0_i32_31 = arith.constant 0 : i32
      %46 = tpu.memref_slice %arg2[%17, %c0_i32_31] : memref<512x128xf32, #tpu.memory_space<any>> -> memref<1x128xf32, #tpu.memory_space<any>>
      %c7_i32_32 = arith.constant 7 : i32
      %c0_i32_33 = arith.constant 0 : i32
      %47 = tpu.memref_slice %arg6[%c7_i32_32, %c0_i32_33] : memref<8x128xf32, #tpu.memory_space<vmem>> -> memref<1x128xf32, #tpu.memory_space<vmem>>
      %48 = tpu.memref_slice %arg7[%c7_i32] : memref<8x!tpu.dma_semaphore, #tpu.memory_space<semaphore_mem>> -> memref<1x!tpu.dma_semaphore, #tpu.memory_space<semaphore_mem>>
      %49 = tpu.memref_squeeze %48 : memref<1x!tpu.dma_semaphore, #tpu.memory_space<semaphore_mem>> -> memref<!tpu.dma_semaphore, #tpu.memory_space<semaphore_mem>>
      tpu.enqueue_dma source(%46 : memref<1x128xf32, #tpu.memory_space<any>>) target(%47 : memref<1x128xf32, #tpu.memory_space<vmem>>) target_semaphore(%49 : memref<!tpu.dma_semaphore, #tpu.memory_space<semaphore_mem>>)
      %c0_i32_34 = arith.constant 0 : i32
      %c0_i32_35 = arith.constant 0 : i32
      %50 = tpu.memref_slice %arg2[%10, %c0_i32_35] : memref<512x128xf32, #tpu.memory_space<any>> -> memref<1x128xf32, #tpu.memory_space<any>>
      %c0_i32_36 = arith.constant 0 : i32
      %c0_i32_37 = arith.constant 0 : i32
      %51 = tpu.memref_slice %arg6[%c0_i32_36, %c0_i32_37] : memref<8x128xf32, #tpu.memory_space<vmem>> -> memref<1x128xf32, #tpu.memory_space<vmem>>
      %52 = tpu.memref_slice %arg7[%c0_i32_34] : memref<8x!tpu.dma_semaphore, #tpu.memory_space<semaphore_mem>> -> memref<1x!tpu.dma_semaphore, #tpu.memory_space<semaphore_mem>>
      %53 = tpu.memref_squeeze %52 : memref<1x!tpu.dma_semaphore, #tpu.memory_space<semaphore_mem>> -> memref<!tpu.dma_semaphore, #tpu.memory_space<semaphore_mem>>
      tpu.wait_dma2 semaphore(%53 : memref<!tpu.dma_semaphore, #tpu.memory_space<semaphore_mem>>) src(%50 : memref<1x128xf32, #tpu.memory_space<any>>) dst(%51 : memref<1x128xf32, #tpu.memory_space<vmem>>)
      %c1_i32_38 = arith.constant 1 : i32
      %c0_i32_39 = arith.constant 0 : i32
      %54 = tpu.memref_slice %arg2[%11, %c0_i32_39] : memref<512x128xf32, #tpu.memory_space<any>> -> memref<1x128xf32, #tpu.memory_space<any>>
      %c1_i32_40 = arith.constant 1 : i32
      %c0_i32_41 = arith.constant 0 : i32
      %55 = tpu.memref_slice %arg6[%c1_i32_40, %c0_i32_41] : memref<8x128xf32, #tpu.memory_space<vmem>> -> memref<1x128xf32, #tpu.memory_space<vmem>>
      %56 = tpu.memref_slice %arg7[%c1_i32_38] : memref<8x!tpu.dma_semaphore, #tpu.memory_space<semaphore_mem>> -> memref<1x!tpu.dma_semaphore, #tpu.memory_space<semaphore_mem>>
      %57 = tpu.memref_squeeze %56 : memref<1x!tpu.dma_semaphore, #tpu.memory_space<semaphore_mem>> -> memref<!tpu.dma_semaphore, #tpu.memory_space<semaphore_mem>>
      tpu.wait_dma2 semaphore(%57 : memref<!tpu.dma_semaphore, #tpu.memory_space<semaphore_mem>>) src(%54 : memref<1x128xf32, #tpu.memory_space<any>>) dst(%55 : memref<1x128xf32, #tpu.memory_space<vmem>>)
      %c2_i32_42 = arith.constant 2 : i32
      %c0_i32_43 = arith.constant 0 : i32
      %58 = tpu.memref_slice %arg2[%12, %c0_i32_43] : memref<512x128xf32, #tpu.memory_space<any>> -> memref<1x128xf32, #tpu.memory_space<any>>
      %c2_i32_44 = arith.constant 2 : i32
      %c0_i32_45 = arith.constant 0 : i32
      %59 = tpu.memref_slice %arg6[%c2_i32_44, %c0_i32_45] : memref<8x128xf32, #tpu.memory_space<vmem>> -> memref<1x128xf32, #tpu.memory_space<vmem>>
      %60 = tpu.memref_slice %arg7[%c2_i32_42] : memref<8x!tpu.dma_semaphore, #tpu.memory_space<semaphore_mem>> -> memref<1x!tpu.dma_semaphore, #tpu.memory_space<semaphore_mem>>
      %61 = tpu.memref_squeeze %60 : memref<1x!tpu.dma_semaphore, #tpu.memory_space<semaphore_mem>> -> memref<!tpu.dma_semaphore, #tpu.memory_space<semaphore_mem>>
      tpu.wait_dma2 semaphore(%61 : memref<!tpu.dma_semaphore, #tpu.memory_space<semaphore_mem>>) src(%58 : memref<1x128xf32, #tpu.memory_space<any>>) dst(%59 : memref<1x128xf32, #tpu.memory_space<vmem>>)
      %c3_i32_46 = arith.constant 3 : i32
      %c0_i32_47 = arith.constant 0 : i32
      %62 = tpu.memref_slice %arg2[%13, %c0_i32_47] : memref<512x128xf32, #tpu.memory_space<any>> -> memref<1x128xf32, #tpu.memory_space<any>>
      %c3_i32_48 = arith.constant 3 : i32
      %c0_i32_49 = arith.constant 0 : i32
      %63 = tpu.memref_slice %arg6[%c3_i32_48, %c0_i32_49] : memref<8x128xf32, #tpu.memory_space<vmem>> -> memref<1x128xf32, #tpu.memory_space<vmem>>
      %64 = tpu.memref_slice %arg7[%c3_i32_46] : memref<8x!tpu.dma_semaphore, #tpu.memory_space<semaphore_mem>> -> memref<1x!tpu.dma_semaphore, #tpu.memory_space<semaphore_mem>>
      %65 = tpu.memref_squeeze %64 : memref<1x!tpu.dma_semaphore, #tpu.memory_space<semaphore_mem>> -> memref<!tpu.dma_semaphore, #tpu.memory_space<semaphore_mem>>
      tpu.wait_dma2 semaphore(%65 : memref<!tpu.dma_semaphore, #tpu.memory_space<semaphore_mem>>) src(%62 : memref<1x128xf32, #tpu.memory_space<any>>) dst(%63 : memref<1x128xf32, #tpu.memory_space<vmem>>)
      %c4_i32_50 = arith.constant 4 : i32
      %c0_i32_51 = arith.constant 0 : i32
      %66 = tpu.memref_slice %arg2[%14, %c0_i32_51] : memref<512x128xf32, #tpu.memory_space<any>> -> memref<1x128xf32, #tpu.memory_space<any>>
      %c4_i32_52 = arith.constant 4 : i32
      %c0_i32_53 = arith.constant 0 : i32
      %67 = tpu.memref_slice %arg6[%c4_i32_52, %c0_i32_53] : memref<8x128xf32, #tpu.memory_space<vmem>> -> memref<1x128xf32, #tpu.memory_space<vmem>>
      %68 = tpu.memref_slice %arg7[%c4_i32_50] : memref<8x!tpu.dma_semaphore, #tpu.memory_space<semaphore_mem>> -> memref<1x!tpu.dma_semaphore, #tpu.memory_space<semaphore_mem>>
      %69 = tpu.memref_squeeze %68 : memref<1x!tpu.dma_semaphore, #tpu.memory_space<semaphore_mem>> -> memref<!tpu.dma_semaphore, #tpu.memory_space<semaphore_mem>>
      tpu.wait_dma2 semaphore(%69 : memref<!tpu.dma_semaphore, #tpu.memory_space<semaphore_mem>>) src(%66 : memref<1x128xf32, #tpu.memory_space<any>>) dst(%67 : memref<1x128xf32, #tpu.memory_space<vmem>>)
      %c5_i32_54 = arith.constant 5 : i32
      %c0_i32_55 = arith.constant 0 : i32
      %70 = tpu.memref_slice %arg2[%15, %c0_i32_55] : memref<512x128xf32, #tpu.memory_space<any>> -> memref<1x128xf32, #tpu.memory_space<any>>
      %c5_i32_56 = arith.constant 5 : i32
      %c0_i32_57 = arith.constant 0 : i32
      %71 = tpu.memref_slice %arg6[%c5_i32_56, %c0_i32_57] : memref<8x128xf32, #tpu.memory_space<vmem>> -> memref<1x128xf32, #tpu.memory_space<vmem>>
      %72 = tpu.memref_slice %arg7[%c5_i32_54] : memref<8x!tpu.dma_semaphore, #tpu.memory_space<semaphore_mem>> -> memref<1x!tpu.dma_semaphore, #tpu.memory_space<semaphore_mem>>
      %73 = tpu.memref_squeeze %72 : memref<1x!tpu.dma_semaphore, #tpu.memory_space<semaphore_mem>> -> memref<!tpu.dma_semaphore, #tpu.memory_space<semaphore_mem>>
      tpu.wait_dma2 semaphore(%73 : memref<!tpu.dma_semaphore, #tpu.memory_space<semaphore_mem>>) src(%70 : memref<1x128xf32, #tpu.memory_space<any>>) dst(%71 : memref<1x128xf32, #tpu.memory_space<vmem>>)
      %c6_i32_58 = arith.constant 6 : i32
      %c0_i32_59 = arith.constant 0 : i32
      %74 = tpu.memref_slice %arg2[%16, %c0_i32_59] : memref<512x128xf32, #tpu.memory_space<any>> -> memref<1x128xf32, #tpu.memory_space<any>>
      %c6_i32_60 = arith.constant 6 : i32
      %c0_i32_61 = arith.constant 0 : i32
      %75 = tpu.memref_slice %arg6[%c6_i32_60, %c0_i32_61] : memref<8x128xf32, #tpu.memory_space<vmem>> -> memref<1x128xf32, #tpu.memory_space<vmem>>
      %76 = tpu.memref_slice %arg7[%c6_i32_58] : memref<8x!tpu.dma_semaphore, #tpu.memory_space<semaphore_mem>> -> memref<1x!tpu.dma_semaphore, #tpu.memory_space<semaphore_mem>>
      %77 = tpu.memref_squeeze %76 : memref<1x!tpu.dma_semaphore, #tpu.memory_space<semaphore_mem>> -> memref<!tpu.dma_semaphore, #tpu.memory_space<semaphore_mem>>
      tpu.wait_dma2 semaphore(%77 : memref<!tpu.dma_semaphore, #tpu.memory_space<semaphore_mem>>) src(%74 : memref<1x128xf32, #tpu.memory_space<any>>) dst(%75 : memref<1x128xf32, #tpu.memory_space<vmem>>)
      %c7_i32_62 = arith.constant 7 : i32
      %c0_i32_63 = arith.constant 0 : i32
      %78 = tpu.memref_slice %arg2[%17, %c0_i32_63] : memref<512x128xf32, #tpu.memory_space<any>> -> memref<1x128xf32, #tpu.memory_space<any>>
      %c7_i32_64 = arith.constant 7 : i32
      %c0_i32_65 = arith.constant 0 : i32
      %79 = tpu.memref_slice %arg6[%c7_i32_64, %c0_i32_65] : memref<8x128xf32, #tpu.memory_space<vmem>> -> memref<1x128xf32, #tpu.memory_space<vmem>>
      %80 = tpu.memref_slice %arg7[%c7_i32_62] : memref<8x!tpu.dma_semaphore, #tpu.memory_space<semaphore_mem>> -> memref<1x!tpu.dma_semaphore, #tpu.memory_space<semaphore_mem>>
      %81 = tpu.memref_squeeze %80 : memref<1x!tpu.dma_semaphore, #tpu.memory_space<semaphore_mem>> -> memref<!tpu.dma_semaphore, #tpu.memory_space<semaphore_mem>>
      tpu.wait_dma2 semaphore(%81 : memref<!tpu.dma_semaphore, #tpu.memory_space<semaphore_mem>>) src(%78 : memref<1x128xf32, #tpu.memory_space<any>>) dst(%79 : memref<1x128xf32, #tpu.memory_space<vmem>>)
    } else {
    }
    %c0 = arith.constant 0 : index
    %c0_1 = arith.constant 0 : index
    %3 = vector.load %arg6[%c0, %c0_1] : memref<8x128xf32, #tpu.memory_space<vmem>>, vector<8x128xf32>
    %c0_2 = arith.constant 0 : index
    %c0_3 = arith.constant 0 : index
    %4 = vector.load %arg3[%c0_2, %c0_3] : memref<128x128xf32, #tpu.memory_space<vmem>>, vector<128x128xf32>
    %cst = arith.constant dense<0.000000e+00> : vector<8x128xf32>
    %5 = tpu.matmul %3, %4, %cst {dimension_numbers = #tpu.dot_dimension_numbers<[1], [1], [0], [0], [0, 0, 1, 0], [], []>} : vector<8x128xf32>, vector<128x128xf32>, vector<8x128xf32> -> vector<8x128xf32>
    %c0_4 = arith.constant 0 : index
    %c0_5 = arith.constant 0 : index
    %6 = vector.load %arg4[%c0_4, %c0_5] : memref<1x128xf32, #tpu.memory_space<vmem>>, vector<1x128xf32>
    %7 = vector.broadcast %6 : vector<1x128xf32> to vector<8x128xf32>
    %8 = arith.addf %5, %7 : vector<8x128xf32>
    %c0_6 = arith.constant 0 : index
    %c0_7 = arith.constant 0 : index
    %9 = vector.load %arg5[%c0_6, %c0_7] : memref<8x128xf32, #tpu.memory_space<vmem>>, vector<8x128xf32>
    tpu.vector_store %arg5[%c0_6, %c0_7], %8 {strides = array<i32>} : memref<8x128xf32, #tpu.memory_space<vmem>>, vector<8x128xf32>,
    return
  }
  func.func @transform_1(%arg0: i32, %arg1: memref<8xi32, #tpu.memory_space<smem>>) -> (i32, i32) {
    %c0_i32 = arith.constant 0 : i32
    %c0_i32_0 = arith.constant 0 : i32
    return %arg0, %c0_i32 : i32, i32
  }
  func.func @transform_2(%arg0: i32, %arg1: memref<8xi32, #tpu.memory_space<smem>>) -> (i32, i32) {
    %c0_i32 = arith.constant 0 : i32
    %c0_i32_0 = arith.constant 0 : i32
    return %c0_i32, %arg0 : i32, i32
  }
  func.func @transform_3(%arg0: i32, %arg1: memref<8xi32, #tpu.memory_space<smem>>) -> (i32, i32) {
    %c0_i32 = arith.constant 0 : i32
    %c0_i32_0 = arith.constant 0 : i32
    return %c0_i32, %arg0 : i32, i32
  }
}

</mosaic_0001>

<llo_original>
// kernel: skipgram_forward.1
$region0: #{skipgram_forward.1}
  #allocation0 [shape = 'u32[]', space=smem, size = 0x4, offset = 0x4, fixed_abs, tag = 'smem constant byte address 0x4 - core index']
  #allocation1 [shape = 'u32[144,128]{1,0:T(1,128)}', space=vmem, size = 0x12000, scoped, tag = 'internal scratch']
  #allocation2 [shape = 'f32[8,128]{1,0:T(8,128)}', space=vmem, size = 0x1000, scoped, tag = 'scratch operand']
  #allocation3 [shape = 's32[8]{0}', space=sflag, size = 0x20, scoped, tag = 'scratch operand']
  #allocation4 [shape = 's32[1]{0}', space=sflag, size = 0x4, scoped, tag = 'scoped memory for skipgram_forward.1']
  #allocation5 [shape = 'u8[512]{0}', space=smem, size = 0x200, scoped, tag = 'prefetched SMEM operand 0']
  #allocation10 [shape = 's32[]', space=sflag, size = 0x4, offset = 0, fixed_abs, tag = 'sflag constant byte address 0x0 - dummy sync flag']
  #allocation11 [shape = 's32[]', space=sflag, size = 0x4, offset = 0, fixed_abs, tag = 'sflag constant byte address 0x0 - dummy sync flag']
  #allocation12 [shape = 'u32[]', space=smem, size = 0x4, offset = 0x44, fixed_abs, tag = 'smem constant byte address 0x44 - assertion arg 0']
  #allocation13 [shape = 'u32[]', space=smem, size = 0x4, offset = 0x48, fixed_abs, tag = 'smem constant byte address 0x48 - assertion arg 1']
  #allocation14 [shape = 's32[]', space=sflag, size = 0x4, offset = 0, fixed_abs, tag = 'sflag constant byte address 0x0 - dummy sync flag']
  #allocation15 [shape = 's32[]', space=sflag, size = 0x4, offset = 0, fixed_abs, tag = 'sflag constant byte address 0x0 - dummy sync flag']
  #allocation16 [shape = 's32[]', space=sflag, size = 0x4, offset = 0, fixed_abs, tag = 'sflag constant byte address 0x0 - dummy sync flag']
  #allocation17 [shape = 's32[]', space=sflag, size = 0x4, offset = 0, fixed_abs, tag = 'sflag constant byte address 0x0 - dummy sync flag']
  #allocation18 [shape = 's32[]', space=sflag, size = 0x4, offset = 0, fixed_abs, tag = 'sflag constant byte address 0x0 - dummy sync flag']
  #allocation19 [shape = 's32[]', space=sflag, size = 0x4, offset = 0, fixed_abs, tag = 'sflag constant byte address 0x0 - dummy sync flag']
  #allocation20 [shape = 's32[]', space=sflag, size = 0x4, offset = 0, fixed_abs, tag = 'sflag constant byte address 0x0 - dummy sync flag']
  #allocation21 [shape = 's32[]', space=sflag, size = 0x4, offset = 0, fixed_abs, tag = 'sflag constant byte address 0x0 - dummy sync flag']
  #allocation22 [shape = 's32[]', space=sflag, size = 0x4, offset = 0, fixed_abs, tag = 'sflag constant byte address 0x0 - dummy sync flag']
  #allocation23 [shape = 's32[]', space=sflag, size = 0x4, offset = 0, fixed_abs, tag = 'sflag constant byte address 0x0 - dummy sync flag']
  #allocation24 [shape = 's32[]', space=sflag, size = 0x4, offset = 0, fixed_abs, tag = 'sflag constant byte address 0x0 - dummy sync flag']
  #allocation25 [shape = 's32[]', space=sflag, size = 0x4, offset = 0, fixed_abs, tag = 'sflag constant byte address 0x0 - dummy sync flag']
  #allocation26 [shape = 's32[]', space=sflag, size = 0x4, offset = 0, fixed_abs, tag = 'sflag constant byte address 0x0 - dummy sync flag']
  #allocation27 [shape = 's32[]', space=sflag, size = 0x4, offset = 0, fixed_abs, tag = 'sflag constant byte address 0x0 - dummy sync flag']
  %s0 = inlined_call_operand.vmem [shape: s32[8], index: 0, kind: input, shape index: {}]
  %s1 = inlined_call_operand.hbm [shape: f32[512,128], index: 1, kind: input, shape index: {}]
  %s2 = inlined_call_operand.hbm [shape: f32[512,128], index: 2, kind: input, shape index: {}]
  %s3 = inlined_call_operand.vmem [shape: f32[1,512], index: 3, kind: input, shape index: {}]
  %s4 = inlined_call_operand.hbm [shape: f32[8,512], index: 4, kind: output, shape index: {}]
  %s5 = sld [smem:[#allocation0]]
  $region81: #{skipgram_forward.1} parent=0
    _
  %s7 = ssub.s32 1, %s5
  %s8 = scalar_select 0, %s7, %s5
  %s9 = sshll.u32 %s0, 4
  %s10 = int_to_ptr.vmem [resolvable:$true] %s9
  %12 = dma.vmem_to_smem %s10, 16, [#allocation5], [#allocation4]
  %13 = dma.done [#allocation4], 16
  %14 = sfence
  $region1: #{skipgram_forward.1} parent=0
    #allocation6 [shape = 'u8[131072]{0}', space=vmem, size = 0x20000, scoped, tag = 'input window, operand 2']
    #allocation7 [shape = 's32[2]{0}', space=sflag, size = 0x8, scoped, tag = 'scoped memory for skipgram_forward.1']
    #allocation8 [shape = 's32[2]{0}', space=sflag, size = 0x8, scoped, tag = 'scoped memory for skipgram_forward.1']
    #allocation9 [shape = 'u8[8192]{0}', space=vmem, size = 0x2000, scoped, tag = 'output window, operand 0']
    %15 = vsyncpa [#allocation7], 0
    %s16 = scalar_lea.sflag [#allocation7], 1
    %17 = vsyncpa %s16, 0
    %18 = vsyncpa [#allocation8], 0
    %s19 = scalar_lea.sflag [#allocation8], 1
    %20 = vsyncpa %s19, 0
    loop: start=0, step=1, limit=6
    $region2: #{skipgram_forward.1} parent=1 // loop_pre_header
      _
    $region3: #{skipgram_forward.1} parent=1 // loop_header
      %s22 = sphi 0, %s26
      %p23 = scmp.ge.s32.totalorder %s22, 6
      %s32 = sphi 0, %s34
      %s35 = sphi 0, %s32
      %s36 = sphi 0, %s35
      %s52 = sphi 0, %s36
      %s58 = sphi 0, %s60
      %s61 = sphi 0, %s58
      %s62 = sphi 0, %s61
      %s78 = sphi 0, %s62
      %s84 = sphi 0, %s86
      %s87 = sphi 0, %s84
      %s88 = sphi 0, %s87
      %s104 = sphi 0, %s88
    $region4: #{skipgram_forward.1} parent=1 // loop_header_branch
      %25 = sbr.rel (%p23) target = $region8
    $region5: #{skipgram_forward.1} parent=1 // loop_body
      %s27 = ssub.s32 %s22, 1
      %s28 = ssub.s32 %s22, 2
      %s29 = sadd.s32 %s22, 1
      %s30 = ssub.s32 %s22, %s29
      %p31 = scmp.eq.s32.totalorder %s30, 0
      %s33 = sadd.s32 %s32, 1
      %s34 = scalar_select %p31, %s32, %s33
      %p37 = pneg %p31
      %p38 = scmp.eq.s32.totalorder %s22, 3
      %p39 = por %p37, %p38
      %p40 = scmp.ne.s32.totalorder %s32, %s35
      %p41 = scmp.eq.s32.totalorder %s22, 0
      %p42 = por %p40, %p41
      %p43 = scmp.ne.s32.totalorder %s32, %s35
      %p44 = scmp.eq.s32.totalorder %s27, 3
      %p45 = por %p43, %p44
      %p46 = scmp.ne.s32.totalorder %s35, %s36
      %p47 = scmp.eq.s32.totalorder %s27, 0
      %p48 = por %p46, %p47
      %p49 = scmp.ne.s32.totalorder %s35, %s36
      %p50 = scmp.eq.s32.totalorder %s28, 3
      %p51 = por %p49, %p50
      %p53 = scmp.ne.s32.totalorder %s36, %s52
      %p54 = scmp.eq.s32.totalorder %s28, 0
      %p55 = por %p53, %p54
      %s56 = ssub.s32 %s22, %s29
      %p57 = scmp.eq.s32.totalorder %s56, 0
      %s59 = sadd.s32 %s58, 1
      %s60 = scalar_select %p57, %s58, %s59
      %p63 = pneg %p57
      %p64 = scmp.eq.s32.totalorder %s22, 3
      %p65 = por %p63, %p64
      %p66 = scmp.ne.s32.totalorder %s58, %s61
      %p67 = scmp.eq.s32.totalorder %s22, 0
      %p68 = por %p66, %p67
      %p69 = scmp.ne.s32.totalorder %s58, %s61
      %p70 = scmp.eq.s32.totalorder %s27, 3
      %p71 = por %p69, %p70
      %p72 = scmp.ne.s32.totalorder %s61, %s62
      %p73 = scmp.eq.s32.totalorder %s27, 0
      %p74 = por %p72, %p73
      %p75 = scmp.ne.s32.totalorder %s61, %s62
      %p76 = scmp.eq.s32.totalorder %s28, 3
      %p77 = por %p75, %p76
      %p79 = scmp.ne.s32.totalorder %s62, %s78
      %p80 = scmp.eq.s32.totalorder %s28, 0
      %p81 = por %p79, %p80
      %s82 = ssub.s32 %s22, %s29
      %p83 = scmp.eq.s32.totalorder %s82, 0
      %s85 = sadd.s32 %s84, 1
      %s86 = scalar_select %p83, %s84, %s85
      %p89 = pneg %p83
      %p90 = scmp.eq.s32.totalorder %s22, 3
      %p91 = por %p89, %p90
      %p92 = scmp.ne.s32.totalorder %s84, %s87
      %p93 = scmp.eq.s32.totalorder %s22, 0
      %p94 = por %p92, %p93
      %p95 = scmp.ne.s32.totalorder %s84, %s87
      %p96 = scmp.eq.s32.totalorder %s27, 3
      %p97 = por %p95, %p96
      %p98 = scmp.ne.s32.totalorder %s87, %s88
      %p99 = scmp.eq.s32.totalorder %s27, 0
      %p100 = por %p98, %p99
      %p101 = scmp.ne.s32.totalorder %s87, %s88
      %p102 = scmp.eq.s32.totalorder %s28, 3
      %p103 = por %p101, %p102
      %p105 = scmp.ne.s32.totalorder %s88, %s104
      %p106 = scmp.eq.s32.totalorder %s28, 0
      %p107 = por %p105, %p106
      %p108 = scmp.le.s32.totalorder 1, %s22
      %p109 = scmp.lt.s32.totalorder %s22, 5
      %p110 = pnand %p108, %p109
      %p111 = pneg %p110
      // Predicated region
      $region9: #{skipgram_forward.1} parent=5 // pred_check
        _
      $region10: #{skipgram_forward.1} parent=5 // pred_check_branch
        %113 = sbr.rel (%p110) target = $region12
      $region11: #{skipgram_forward.1} parent=5 // pred_region
        %s114 = ssub.s32 %s22, 1
      $region12: #{skipgram_forward.1} parent=5 // pred_fallthru
        _
      %p115 = scmp.lt.s32.totalorder %s22, 4
      // Predicated region
      $region13: #{skipgram_forward.1} parent=5 // pred_check
        %p116 = pneg %p115
      $region14: #{skipgram_forward.1} parent=5 // pred_check_branch
        %118 = sbr.rel (%p116) target = $region16
      $region15: #{skipgram_forward.1} parent=5 // pred_region
        // Predicated region
        $region17: #{skipgram_forward.1} parent=15 // pred_check
          %p119 = pneg %p42
        $region18: #{skipgram_forward.1} parent=15 // pred_check_branch
          %121 = sbr.rel (%p119) target = $region20
        $region19: #{skipgram_forward.1} parent=15 // pred_region
          %s122 = sand.u32 %s32, 1
          %s123 = scalar_lea.sflag [#allocation7], %s122
          %s124 = sand.u32 %s32, 1
          %s125 = smul.addr %s124, 128
          %s126 = scalar_lea.vmem [#allocation6], %s125
          %s127 = smul.u32 16, %s22
          %s129 = ssub.s32 2048, 2048
          %130 = vsyncadd %s123, %s129
          %s131 = smul.addr %s127, 128
          %s132 = scalar_lea.hbm %s2, %s131
          %s133 = sshll.u32 %s126, 4
          %s134 = int_to_ptr.vmem [resolvable:$true] %s133
          %139 = dma.hbm_to_vmem [thread:$0]  %s132, 2048, %s134, %s123, 128, 128, 8
        $region20: #{skipgram_forward.1} parent=15 // pred_fallthru
          _
        // Predicated region
        $region21: #{skipgram_forward.1} parent=15 // pred_check
          %p140 = pneg %p68
        $region22: #{skipgram_forward.1} parent=15 // pred_check_branch
          %142 = sbr.rel (%p140) target = $region24
        $region23: #{skipgram_forward.1} parent=15 // pred_region
          %p143 = scmp.lt.s32.totalorder %s22, 3
          %s144 = scalar_select %p143, %s22, 3
          %s145 = scalar_lea.vmem %s3, %s144
        $region24: #{skipgram_forward.1} parent=15 // pred_fallthru
          _
      $region16: #{skipgram_forward.1} parent=5 // pred_fallthru
        _
      %p146 = scmp.le.s32.totalorder 1, %s22
      %p147 = scmp.lt.s32.totalorder %s22, 5
      %p148 = pnand %p146, %p147
      %p149 = pneg %p148
      // Predicated region
      $region25: #{skipgram_forward.1} parent=5 // pred_check
        _
      $region26: #{skipgram_forward.1} parent=5 // pred_check_branch
        %151 = sbr.rel (%p148) target = $region28
      $region27: #{skipgram_forward.1} parent=5 // pred_region
        %s152 = ssub.s32 %s22, 1
        %s153 = sand.u32 %s35, 1
        %s154 = scalar_lea.sflag [#allocation7], %s153
        %s155 = sand.u32 %s35, 1
        %s156 = smul.addr %s155, 128
        %s157 = scalar_lea.vmem [#allocation6], %s156
        // Predicated region
        $region29: #{skipgram_forward.1} parent=27 // pred_check
          %p158 = pneg %p48
        $region30: #{skipgram_forward.1} parent=27 // pred_check_branch
          %160 = sbr.rel (%p158) target = $region32
        $region31: #{skipgram_forward.1} parent=27 // pred_region
          %161 = dma.done %s154, 2048
        $region32: #{skipgram_forward.1} parent=27 // pred_fallthru
          _
        %s162 = sand.u32 %s35, 1
        %s163 = scalar_lea.sflag [#allocation7], %s162
        %s164 = sand.u32 %s35, 1
        %s165 = smul.addr %s164, 128
        %s166 = scalar_lea.vmem [#allocation6], %s165
        %p167 = pneg %p48
        %p168 = pneg %p45
        %p169 = scmp.lt.s32.totalorder %s27, 3
        %s170 = scalar_select %p169, %s27, 3
        %s171 = scalar_lea.vmem %s3, %s170
        %p172 = pneg %p74
        %p173 = pneg %p71
        %p174 = pneg %p100
        %p175 = pneg %p97
        %s176 = sand.u32 %s87, 1
        %s177 = scalar_lea.sflag [#allocation8], %s176
        %s178 = sand.u32 %s87, 1
        %s179 = smul.addr %s178, 8
        %s180 = scalar_lea.vmem [#allocation9], %s179
        %s181 = smul.u32 16, %s27
        %p182 = scmp.lt.s32.totalorder %s27, 3
        %s183 = scalar_select %p182, %s27, 3
        %s184 = scalar_lea.vmem %s3, %s183
        %p185 = scmp.eq.s32.totalorder %s27, 0
        // Predicated region
        $region33: #{skipgram_forward.1} parent=27 // pred_check
          %p186 = pneg %p185
        $region34: #{skipgram_forward.1} parent=27 // pred_check_branch
          %188 = sbr.rel (%p186) target = $region36
        $region35: #{skipgram_forward.1} parent=27 // pred_region
          %s189 = sld [smem:[#allocation5]]
          %s190 = sld [smem:[#allocation5 + $0x1]]
          %s191 = sld [smem:[#allocation5 + $0x2]]
          %s192 = sld [smem:[#allocation5 + $0x3]]
          %s193 = sld [smem:[#allocation5 + $0x4]]
          %s194 = sld [smem:[#allocation5 + $0x5]]
          %s195 = sld [smem:[#allocation5 + $0x6]]
          %s196 = sld [smem:[#allocation5 + $0x7]]
          %s197 = smul.addr %s189, 16
          %s198 = scalar_lea.hbm %s1, %s197
          // Predicated region
          $region37: #{skipgram_forward.1} parent=35 // pred_check
            _
          $region38: #{skipgram_forward.1} parent=35 // pred_check_branch
            %200 = sbr.rel target = $region40
          $region39: #{skipgram_forward.1} parent=35 // pred_region
            %201 = sst [smem:[#allocation12]] [#allocation11]
            %202 = sst [smem:[#allocation13]] [#allocation10]
          $region40: #{skipgram_forward.1} parent=35 // pred_fallthru
            _
          %204 = shalt.err (0)
          %s206 = sshll.u32 [#allocation2], 4
          %s207 = int_to_ptr.vmem [resolvable:$true] %s206
          %209 = dma.hbm_to_vmem [thread:$0]  %s198, 16, %s207, [#allocation3]
          %s210 = smul.addr %s190, 16
          %s211 = scalar_lea.hbm %s1, %s210
          %s212 = scalar_lea.vmem [#allocation2], 1
          %s213 = scalar_lea.sflag [#allocation3], 1
          // Predicated region
          $region41: #{skipgram_forward.1} parent=35 // pred_check
            _
          $region42: #{skipgram_forward.1} parent=35 // pred_check_branch
            %215 = sbr.rel target = $region44
          $region43: #{skipgram_forward.1} parent=35 // pred_region
            %216 = sst [smem:[#allocation12]] [#allocation15]
            %217 = sst [smem:[#allocation13]] [#allocation14]
          $region44: #{skipgram_forward.1} parent=35 // pred_fallthru
            _
          %219 = shalt.err (0)
          %s221 = sshll.u32 %s212, 4
          %s222 = int_to_ptr.vmem [resolvable:$true] %s221
          %224 = dma.hbm_to_vmem [thread:$0]  %s211, 16, %s222, %s213
          %s225 = smul.addr %s191, 16
          %s226 = scalar_lea.hbm %s1, %s225
          %s227 = scalar_lea.vmem [#allocation2], 2
          %s228 = scalar_lea.sflag [#allocation3], 2
          // Predicated region
          $region45: #{skipgram_forward.1} parent=35 // pred_check
            _
          $region46: #{skipgram_forward.1} parent=35 // pred_check_branch
            %230 = sbr.rel target = $region48
          $region47: #{skipgram_forward.1} parent=35 // pred_region
            %231 = sst [smem:[#allocation12]] [#allocation17]
            %232 = sst [smem:[#allocation13]] [#allocation16]
          $region48: #{skipgram_forward.1} parent=35 // pred_fallthru
            _
          %234 = shalt.err (0)
          %s236 = sshll.u32 %s227, 4
          %s237 = int_to_ptr.vmem [resolvable:$true] %s236
          %239 = dma.hbm_to_vmem [thread:$0]  %s226, 16, %s237, %s228
          %s240 = smul.addr %s192, 16
          %s241 = scalar_lea.hbm %s1, %s240
          %s242 = scalar_lea.vmem [#allocation2], 3
          %s243 = scalar_lea.sflag [#allocation3], 3
          // Predicated region
          $region49: #{skipgram_forward.1} parent=35 // pred_check
            _
          $region50: #{skipgram_forward.1} parent=35 // pred_check_branch
            %245 = sbr.rel target = $region52
          $region51: #{skipgram_forward.1} parent=35 // pred_region
            %246 = sst [smem:[#allocation12]] [#allocation19]
            %247 = sst [smem:[#allocation13]] [#allocation18]
          $region52: #{skipgram_forward.1} parent=35 // pred_fallthru
            _
          %249 = shalt.err (0)
          %s251 = sshll.u32 %s242, 4
          %s252 = int_to_ptr.vmem [resolvable:$true] %s251
          %254 = dma.hbm_to_vmem [thread:$0]  %s241, 16, %s252, %s243
          %s255 = smul.addr %s193, 16
          %s256 = scalar_lea.hbm %s1, %s255
          %s257 = scalar_lea.vmem [#allocation2], 4
          %s258 = scalar_lea.sflag [#allocation3], 4
          // Predicated region
          $region53: #{skipgram_forward.1} parent=35 // pred_check
            _
          $region54: #{skipgram_forward.1} parent=35 // pred_check_branch
            %260 = sbr.rel target = $region56
          $region55: #{skipgram_forward.1} parent=35 // pred_region
            %261 = sst [smem:[#allocation12]] [#allocation21]
            %262 = sst [smem:[#allocation13]] [#allocation20]
          $region56: #{skipgram_forward.1} parent=35 // pred_fallthru
            _
          %264 = shalt.err (0)
          %s266 = sshll.u32 %s257, 4
          %s267 = int_to_ptr.vmem [resolvable:$true] %s266
          %269 = dma.hbm_to_vmem [thread:$0]  %s256, 16, %s267, %s258
          %s270 = smul.addr %s194, 16
          %s271 = scalar_lea.hbm %s1, %s270
          %s272 = scalar_lea.vmem [#allocation2], 5
          %s273 = scalar_lea.sflag [#allocation3], 5
          // Predicated region
          $region57: #{skipgram_forward.1} parent=35 // pred_check
            _
          $region58: #{skipgram_forward.1} parent=35 // pred_check_branch
            %275 = sbr.rel target = $region60
          $region59: #{skipgram_forward.1} parent=35 // pred_region
            %276 = sst [smem:[#allocation12]] [#allocation23]
            %277 = sst [smem:[#allocation13]] [#allocation22]
          $region60: #{skipgram_forward.1} parent=35 // pred_fallthru
            _
          %279 = shalt.err (0)
          %s281 = sshll.u32 %s272, 4
          %s282 = int_to_ptr.vmem [resolvable:$true] %s281
          %284 = dma.hbm_to_vmem [thread:$0]  %s271, 16, %s282, %s273
          %s285 = smul.addr %s195, 16
          %s286 = scalar_lea.hbm %s1, %s285
          %s287 = scalar_lea.vmem [#allocation2], 6
          %s288 = scalar_lea.sflag [#allocation3], 6
          // Predicated region
          $region61: #{skipgram_forward.1} parent=35 // pred_check
            _
          $region62: #{skipgram_forward.1} parent=35 // pred_check_branch
            %290 = sbr.rel target = $region64
          $region63: #{skipgram_forward.1} parent=35 // pred_region
            %291 = sst [smem:[#allocation12]] [#allocation25]
            %292 = sst [smem:[#allocation13]] [#allocation24]
          $region64: #{skipgram_forward.1} parent=35 // pred_fallthru
            _
          %294 = shalt.err (0)
          %s296 = sshll.u32 %s287, 4
          %s297 = int_to_ptr.vmem [resolvable:$true] %s296
          %299 = dma.hbm_to_vmem [thread:$0]  %s286, 16, %s297, %s288
          %s300 = smul.addr %s196, 16
          %s301 = scalar_lea.hbm %s1, %s300
          %s302 = scalar_lea.vmem [#allocation2], 7
          %s303 = scalar_lea.sflag [#allocation3], 7
          // Predicated region
          $region65: #{skipgram_forward.1} parent=35 // pred_check
            _
          $region66: #{skipgram_forward.1} parent=35 // pred_check_branch
            %305 = sbr.rel target = $region68
          $region67: #{skipgram_forward.1} parent=35 // pred_region
            %306 = sst [smem:[#allocation12]] [#allocation27]
            %307 = sst [smem:[#allocation13]] [#allocation26]
          $region68: #{skipgram_forward.1} parent=35 // pred_fallthru
            _
          %309 = shalt.err (0)
          %s311 = sshll.u32 %s302, 4
          %s312 = int_to_ptr.vmem [resolvable:$true] %s311
          %314 = dma.hbm_to_vmem [thread:$0]  %s301, 16, %s312, %s303
          %s315 = smul.u32 1, 1
          %s316 = sshll.u32 %s315, 4
          %317 = dma.done [#allocation3], %s316
          %s318 = sshll.u32 %s315, 4
          %319 = dma.done %s213, %s318
          %s320 = sshll.u32 %s315, 4
          %321 = dma.done %s228, %s320
          %s322 = sshll.u32 %s315, 4
          %323 = dma.done %s243, %s322
          %s324 = sshll.u32 %s315, 4
          %325 = dma.done %s258, %s324
          %s326 = sshll.u32 %s315, 4
          %327 = dma.done %s273, %s326
          %s328 = sshll.u32 %s315, 4
          %329 = dma.done %s288, %s328
          %s330 = sshll.u32 %s315, 4
          %331 = dma.done %s303, %s330
        $region36: #{skipgram_forward.1} parent=27 // pred_fallthru
          _
        %v332 = vld [vmem:[#allocation2] sm:$0xff]
        %v333 = vld [vmem:[%s157] sm:$0xff]
        %v334 = vld [vmem:[%s157 + $0x8] sm:$0xff]
        %v335 = vld [vmem:[%s157 + $0x10] sm:$0xff]
        %v336 = vld [vmem:[%s157 + $0x18] sm:$0xff]
        %v337 = vld [vmem:[%s157 + $0x20] sm:$0xff]
        %v338 = vld [vmem:[%s157 + $0x28] sm:$0xff]
        %v339 = vld [vmem:[%s157 + $0x30] sm:$0xff]
        %v340 = vld [vmem:[%s157 + $0x38] sm:$0xff]
        %v341 = vld [vmem:[%s157 + $0x40] sm:$0xff]
        %v342 = vld [vmem:[%s157 + $0x48] sm:$0xff]
        %v343 = vld [vmem:[%s157 + $0x50] sm:$0xff]
        %v344 = vld [vmem:[%s157 + $0x58] sm:$0xff]
        %v345 = vld [vmem:[%s157 + $0x60] sm:$0xff]
        %v346 = vld [vmem:[%s157 + $0x68] sm:$0xff]
        %v347 = vld [vmem:[%s157 + $0x70] sm:$0xff]
        %v348 = vld [vmem:[%s157 + $0x78] sm:$0xff]
        %v349 = vld [vmem:[%s184] sm:$0x1]
        %v351 = vlaneseq
        %v352 = vshrl.u32 %v351, 7
        %v353 = vsub.s32 0, %v352
        %v354 = vrot.slane %v349, %v353
        %356 = vmatprep.subr.mxu0 0.0
        %357 = vmatpush1.xpose.msra.mxu0 %v348
        %358 = vmatprep.subr.mxu0 0.0
        %359 = vmatpush1.xpose.msra.mxu0 %v347
        %360 = vmatprep.subr.mxu0 0.0
        %361 = vmatpush1.xpose.msra.mxu0 %v346
        %362 = vmatprep.subr.mxu0 0.0
        %363 = vmatpush1.xpose.msra.mxu0 %v345
        %364 = vmatprep.subr.mxu0 0.0
        %365 = vmatpush1.xpose.msra.mxu0 %v344
        %366 = vmatprep.subr.mxu0 0.0
        %367 = vmatpush1.xpose.msra.mxu0 %v343
        %368 = vmatprep.subr.mxu0 0.0
        %369 = vmatpush1.xpose.msra.mxu0 %v342
        %370 = vmatprep.subr.mxu0 0.0
        %371 = vmatpush1.xpose.msra.mxu0 %v341
        %372 = vmatprep.subr.mxu0 0.0
        %373 = vmatpush1.xpose.msra.mxu0 %v340
        %374 = vmatprep.subr.mxu0 0.0
        %375 = vmatpush1.xpose.msra.mxu0 %v339
        %376 = vmatprep.subr.mxu0 0.0
        %377 = vmatpush1.xpose.msra.mxu0 %v338
        %378 = vmatprep.subr.mxu0 0.0
        %379 = vmatpush1.xpose.msra.mxu0 %v337
        %380 = vmatprep.subr.mxu0 0.0
        %381 = vmatpush1.xpose.msra.mxu0 %v336
        %382 = vmatprep.subr.mxu0 0.0
        %383 = vmatpush1.xpose.msra.mxu0 %v335
        %384 = vmatprep.subr.mxu0 0.0
        %385 = vmatpush1.xpose.msra.mxu0 %v334
        %386 = vmatprep.subr.mxu0 0.0
        %387 = vmatpush1.xpose.msra.mxu0 %v333
        %388 = vmatprep.subr.mxu0 0.0
        %389 = vmatpush2.xpose.msra.mxu0 0.0
        %390 = vmatprep.subr.mxu0 0.0
        %391 = vmatpush2.xpose.msra.mxu0 0.0
        %392 = vmatprep.subr.mxu0 0.0
        %393 = vmatpush2.xpose.msra.mxu0 0.0
        %394 = vmatprep.subr.mxu0 0.0
        %395 = vmatpush2.xpose.msra.mxu0 0.0
        %396 = vmatprep.subr.mxu0 0.0
        %397 = vmatpush2.xpose.msra.mxu0 0.0
        %398 = vmatprep.subr.mxu0 0.0
        %399 = vmatpush2.xpose.msra.mxu0 0.0
        %400 = vmatprep.subr.mxu0 0.0
        %401 = vmatpush2.xpose.msra.mxu0 0.0
        %402 = vmatprep.subr.mxu0 0.0
        %403 = vmatpush2.xpose.msra.mxu0 0.0
        %404 = vmatprep.subr.mxu0 0.0
        %405 = vmatpush2.xpose.msra.mxu0 0.0
        %406 = vmatprep.subr.mxu0 0.0
        %407 = vmatpush2.xpose.msra.mxu0 0.0
        %408 = vmatprep.subr.mxu0 0.0
        %409 = vmatpush2.xpose.msra.mxu0 0.0
        %410 = vmatprep.subr.mxu0 0.0
        %411 = vmatpush2.xpose.msra.mxu0 0.0
        %412 = vmatprep.subr.mxu0 0.0
        %413 = vmatpush2.xpose.msra.mxu0 0.0
        %414 = vmatprep.subr.mxu0 0.0
        %415 = vmatpush2.xpose.msra.mxu0 0.0
        %416 = vmatprep.subr.mxu0 0.0
        %417 = vmatpush2.xpose.msra.mxu0 0.0
        %418 = vmatprep.subr.mxu0 0.0
        %419 = vmatpush2.xpose.msra.mxu0 0.0
        %420 = vmatprep.mubr.f32.mxu0 0.0
        %421 = vmatmul.mubr.f32.gmra.mxu0 %v332
        %v422 = vpop.f32.mrf.mxu0
        %v423 = vadd.f32 %v354, %v422
        %v424 = vpop.f32.mrf.mxu0
        %425 = vdwg.mxu0
        %426 = vst [vmem:[%s180] sm:$0xff] %v423
        %s427 = sand.u32 %s87, 1
        %s428 = scalar_lea.sflag [#allocation8], %s427
        %s429 = sand.u32 %s87, 1
        %s430 = smul.addr %s429, 8
        %s431 = scalar_lea.vmem [#allocation9], %s430
        // Predicated region
        $region69: #{skipgram_forward.1} parent=27 // pred_check
          %p432 = pneg %p97
        $region70: #{skipgram_forward.1} parent=27 // pred_check_branch
          %434 = sbr.rel (%p432) target = $region72
        $region71: #{skipgram_forward.1} parent=27 // pred_region
          %s436 = ssub.s32 128, 128
          %437 = vsyncadd %s428, %s436
          %s438 = smul.addr %s27, 128
          %s439 = scalar_lea.hbm %s4, %s438
          %s441 = sshll.u32 %s431, 4
          %s442 = int_to_ptr.vmem [resolvable:$true] %s441
          %444 = dma.vmem_to_hbm [thread:$0]  %s442, 128, %s439, %s428
        $region72: #{skipgram_forward.1} parent=27 // pred_fallthru
          _
      $region28: #{skipgram_forward.1} parent=5 // pred_fallthru
        _
      %p445 = scmp.le.s32.totalorder 2, %s22
      // Predicated region
      $region73: #{skipgram_forward.1} parent=5 // pred_check
        %p446 = pneg %p445
      $region74: #{skipgram_forward.1} parent=5 // pred_check_branch
        %448 = sbr.rel (%p446) target = $region76
      $region75: #{skipgram_forward.1} parent=5 // pred_region
        %s449 = ssub.s32 %s22, 2
        // Predicated region
        $region77: #{skipgram_forward.1} parent=75 // pred_check
          %p450 = pneg %p103
        $region78: #{skipgram_forward.1} parent=75 // pred_check_branch
          %452 = sbr.rel (%p450) target = $region80
        $region79: #{skipgram_forward.1} parent=75 // pred_region
          %s453 = sand.u32 %s88, 1
          %s454 = scalar_lea.sflag [#allocation8], %s453
          %s455 = sand.u32 %s88, 1
          %s456 = smul.addr %s455, 8
          %s457 = scalar_lea.vmem [#allocation9], %s456
          %458 = dma.done %s454, 128
        $region80: #{skipgram_forward.1} parent=75 // pred_fallthru
          _
      $region76: #{skipgram_forward.1} parent=5 // pred_fallthru
        _
    $region6: #{skipgram_forward.1} parent=1 // loop_footer
      %s26 = sadd.s32 1, %s22
    $region7: #{skipgram_forward.1} parent=1 // loop_footer_branch
      %21 = sbr.rel target = $region3
    $region8: #{skipgram_forward.1} parent=1 // loop_exit
      _
    %459 = vsyncpa [#allocation7], 1
    %s460 = scalar_lea.sflag [#allocation7], 1
    %461 = vsyncpa %s460, 1
    %462 = vsyncpa [#allocation8], 1
    %s463 = scalar_lea.sflag [#allocation8], 1
    %464 = vsyncpa %s463, 1
  %465 = vsyncmov [#allocation3]
  %s466 = vpop.sfrf %465
  %p467 = scmp.eq.s32.totalorder %s466, 0
  %p468 = pneg %p467
  %470 = shalt.err (%p468)
  %s471 = scalar_lea.sflag [#allocation3], 1
  %472 = vsyncmov %s471
  %s473 = vpop.sfrf %472
  %p474 = scmp.eq.s32.totalorder %s473, 0
  %p475 = pneg %p474
  %477 = shalt.err (%p475)
  %s478 = scalar_lea.sflag [#allocation3], 2
  %479 = vsyncmov %s478
  %s480 = vpop.sfrf %479
  %p481 = scmp.eq.s32.totalorder %s480, 0
  %p482 = pneg %p481
  %484 = shalt.err (%p482)
  %s485 = scalar_lea.sflag [#allocation3], 3
  %486 = vsyncmov %s485
  %s487 = vpop.sfrf %486
  %p488 = scmp.eq.s32.totalorder %s487, 0
  %p489 = pneg %p488
  %491 = shalt.err (%p489)
  %s492 = scalar_lea.sflag [#allocation3], 4
  %493 = vsyncmov %s492
  %s494 = vpop.sfrf %493
  %p495 = scmp.eq.s32.totalorder %s494, 0
  %p496 = pneg %p495
  %498 = shalt.err (%p496)
  %s499 = scalar_lea.sflag [#allocation3], 5
  %500 = vsyncmov %s499
  %s501 = vpop.sfrf %500
  %p502 = scmp.eq.s32.totalorder %s501, 0
  %p503 = pneg %p502
  %505 = shalt.err (%p503)
  %s506 = scalar_lea.sflag [#allocation3], 6
  %507 = vsyncmov %s506
  %s508 = vpop.sfrf %507
  %p509 = scmp.eq.s32.totalorder %s508, 0
  %p510 = pneg %p509
  %512 = shalt.err (%p510)
  %s513 = scalar_lea.sflag [#allocation3], 7
  %514 = vsyncmov %s513
  %s515 = vpop.sfrf %514
  %p516 = scmp.eq.s32.totalorder %s515, 0
  %p517 = pneg %p516
  %519 = shalt.err (%p517)

</llo_original>
